<compile_context>
chip_gen: v6e
topology: v6e:2x2x1
jax: 0.10.0
libtpu: 0.0.40
codegen_flags: <defaults>
</compile_context>

<pallas_src>
import functools

import jax
import jax.numpy as jnp
from jax.experimental import pallas as pl
from jax.experimental.pallas import tpu as pltpu


def _round_up(v, m):
    return -(-v // m) * m


def mlp_kernel(xT_ref, w1T_ref, b1_ref, w2T_ref, b2_ref, w3_ref, b3_ref, o_ref,
               *, approx):
    mxu_dtype = w1T_ref.dtype          # f32 or bf16, chosen by the wrapper

    xT = xT_ref[...]                                            # (S, TB)

    # Layer 1: (H, S) @ (S, TB) -> (H, TB); f32 accumulation on the MXU, batch
    # on the 128-lane axis.  Bias + relu stay f32 (v5e VPU has no bf16 path).
    h1 = jnp.dot(w1T_ref[...], xT, preferred_element_type=jnp.float32)
    h1 = jnp.maximum(h1 + b1_ref[...], 0.0)                     # (H, TB) f32

    # Layer 2: (H, H) @ (H, TB) -> (H, TB).
    h2 = jnp.dot(w2T_ref[...], h1.astype(mxu_dtype),
                 preferred_element_type=jnp.float32)
    h2 = jnp.maximum(h2 + b2_ref[...], 0.0)                     # (H, TB) f32

    # Layer 3 (H -> 1): sublane reduce over H (XLU) instead of a 1-column MXU
    # pass; result is already a lane-dense (1, TB) row.
    logits = jnp.sum(h2 * w3_ref[...], axis=0, keepdims=True) + b3_ref[...]

    # Sigmoid: exp goes to the EUP; approx reciprocal also lives in the EUP
    # slot (set approx=False for ~1e-5 agreement with the f32 reference).
    prob = pl.reciprocal(1.0 + jnp.exp(-logits), approx=approx)  # (1, TB)

    # Lane-major store, no relayout needed.
    o_ref[...] = prob[None].astype(o_ref.dtype)                  # (1, 1, TB)


def mlp_forward(x, params, *, mxu_dtype=jnp.bfloat16, approx=True,
                tile_batch=2048):
    """x: [B, state_dim] f32; params: W1,b1,W2,b2,W3,b3 with W as [in, out]."""
    B, S = x.shape
    H = params["w1"].shape[1]

    # --- Batch tiling: few, fat tiles; >= 2 grid steps (v7x megacore) when the
    # batch spans more than one 128-lane tile.
    b128 = _round_up(B, 128)
    if b128 <= 128:
        tb = b128                                   # single 128-lane tile
    else:
        n_target = max(2, -(-b128 // tile_batch))
        tb = _round_up(-(-b128 // n_target), 128)
    n_tiles = -(-b128 // tb)
    b_pad = n_tiles * tb

    # --- Operand prep (transposed dataflow): x^T, W^T; MXU operands in
    # mxu_dtype, everything else f32.
    xT = jnp.pad(x, ((0, b_pad - B), (0, 0))).T.astype(mxu_dtype)   # (S, b_pad)
    w1T = params["w1"].T.astype(mxu_dtype)                          # (H, S)
    w2T = params["w2"].T.astype(mxu_dtype)                          # (H, H)
    b1 = params["b1"].reshape(H, 1).astype(jnp.float32)
    b2 = params["b2"].reshape(H, 1).astype(jnp.float32)
    w3 = params["w3"].reshape(H, 1).astype(jnp.float32)
    b3 = params["b3"].reshape(1, 1).astype(jnp.float32)

    # VMEM-resident operands: constant block index across the batch grid.
    resident = lambda shape: pl.BlockSpec(shape, lambda i: (0,) * len(shape))

    # --- Explicit VMEM budget (double-buffered blocks + intermediates),
    # with 4x headroom, clamped to a level safe on v5e/v6e/v7x.
    isz = jnp.dtype(mxu_dtype).itemsize

    def _pad2(rows, cols, itemsize):
        return _round_up(max(rows, 1), 8) * _round_up(max(cols, 1), 128) * itemsize

    vmem_est = (
        2 * _pad2(S, tb, isz)                              # x^T block
        + 2 * _pad2(1, tb, 4)                              # output block
        + 2 * (_pad2(H, S, isz) + _pad2(H, H, isz))        # W1^T, W2^T
        + 2 * (3 * _pad2(H, 1, 4) + _pad2(1, 1, 4))        # b1, b2, w3, b3
        + 6 * _pad2(H, tb, 4)                              # h1/h2 temporaries
    )
    vmem_limit = int(min(max(4 * vmem_est, 8 * 1024 * 1024), 32 * 1024 * 1024))

    cost = pl.CostEstimate(
        flops=2 * b_pad * (S * H + H * H + H),
        transcendentals=b_pad,
        bytes_accessed=(isz * b_pad * S + isz * (S * H + H * H)
                        + 4 * (3 * H + 1) + 4 * b_pad),
    )

    out = pl.pallas_call(
        functools.partial(mlp_kernel, approx=approx),
        out_shape=jax.ShapeDtypeStruct((n_tiles, 1, tb), jnp.float32),
        grid=(n_tiles,),
        in_specs=[
            pl.BlockSpec((S, tb), lambda i: (0, i)),   # x^T tile (batch on lanes)
            resident((H, S)),                          # W1^T
            resident((H, 1)),                          # b1
            resident((H, H)),                          # W2^T
            resident((H, 1)),                          # b2
            resident((H, 1)),                          # W3 column
            resident((1, 1)),                          # b3
        ],
        out_specs=pl.BlockSpec((1, 1, tb), lambda i: (i, 0, 0)),
        compiler_params=pltpu.CompilerParams(
            dimension_semantics=("parallel",),         # megacore on v7x
            vmem_limit_bytes=vmem_limit,
        ),
        cost_estimate=cost,
    )(xT, w1T, b1, w2T, b2, w3, b3)

    return out.reshape(b_pad, 1)[:B]


def init_params(key, state_dim, hidden_dim):
    """Deterministic init matching nn.Linear's U(-1/sqrt(fan_in), 1/sqrt(fan_in))."""
    ks = jax.random.split(key, 6)

    def linear(kw, kb, fan_in, fan_out):
        bound = 1.0 / jnp.sqrt(fan_in)
        w = jax.random.uniform(kw, (fan_in, fan_out), jnp.float32, -bound, bound)
        b = jax.random.uniform(kb, (fan_out,), jnp.float32, -bound, bound)
        return w, b

    w1, b1 = linear(ks[0], ks[1], state_dim, hidden_dim)
    w2, b2 = linear(ks[2], ks[3], hidden_dim, hidden_dim)
    w3, b3 = linear(ks[4], ks[5], hidden_dim, 1)
    return {"w1": w1, "b1": b1, "w2": w2, "b2": b2, "w3": w3, "b3": b3}


def mlp_reference(x, params):
    h1 = jnp.maximum(x @ params["w1"] + params["b1"], 0.0)
    h2 = jnp.maximum(h1 @ params["w2"] + params["b2"], 0.0)
    return jax.nn.sigmoid(h2 @ params["w3"] + params["b3"])


if __name__ == "__main__":
    key = jax.random.PRNGKey(0)
    k_x, k_x2, k_p = jax.random.split(key, 3)

    state_dim, hidden_dim = 4, 32
    params = init_params(k_p, state_dim, hidden_dim)

    # Small batch (module-sized): single 128-lane tile, padded from 8 rows.
    x_small = jax.random.normal(k_x, (8, state_dim), jnp.float32)
    ref_small = mlp_reference(x_small, params)

    # Default fast path: bf16 MXU operands + approx sigmoid reciprocal.
    out_small = jax.block_until_ready(mlp_forward(x_small, params))
    assert out_small.shape == (8, 1), out_small.shape
    assert jnp.allclose(out_small, ref_small, atol=2e-2)

    # Exact path: f32 MXU operands + exact reciprocal -> 1e-5 agreement.
    out_small_exact = jax.block_until_ready(
        mlp_forward(x_small, params, mxu_dtype=jnp.float32, approx=False))
    assert jnp.allclose(out_small_exact, ref_small, atol=1e-5, rtol=1e-5)

    # Larger batch: exercises the >=2-step batch grid (2 tiles of 384) + pad/slice.
    x_big = jax.random.normal(k_x2, (600, state_dim), jnp.float32)
    ref_big = mlp_reference(x_big, params)

    out_big = jax.block_until_ready(mlp_forward(x_big, params))
    assert out_big.shape == (600, 1), out_big.shape
    assert jnp.allclose(out_big, ref_big, atol=2e-2)

    out_big_exact = jax.block_until_ready(
        mlp_forward(x_big, params, mxu_dtype=jnp.float32, approx=False))
    assert jnp.allclose(out_big_exact, ref_big, atol=1e-5, rtol=1e-5)

    print("KERNEL_OK")
</pallas_src>

<mosaic_0001>
module attributes {stable_mosaic.version = 11 : i64} {
  func.func @mlp_kernel(%arg0: i32, %arg1: memref<4x128xbf16, #tpu.memory_space<vmem>>, %arg2: memref<32x4xbf16, #tpu.memory_space<vmem>>, %arg3: memref<32x1xf32, #tpu.memory_space<vmem>>, %arg4: memref<32x32xbf16, #tpu.memory_space<vmem>>, %arg5: memref<32x1xf32, #tpu.memory_space<vmem>>, %arg6: memref<32x1xf32, #tpu.memory_space<vmem>>, %arg7: memref<1x1xf32, #tpu.memory_space<vmem>>, %arg8: memref<1x1x128xf32, #tpu.memory_space<vmem>>) attributes {dimension_semantics = [#tpu.dimension_semantics<parallel>], iteration_bounds = array<i64: 1>, scalar_prefetch = 0 : i64, scratch_operands = 0 : i64, tpu.core_type = #tpu.core_type<tc>, window_params = [{transform_indices = @transform_0, window_bounds = array<i64: 4, 128>}, {pipeline_mode = #tpu.pipeline_mode<synchronous>, transform_indices = @transform_1, window_bounds = array<i64: 32, 4>}, {pipeline_mode = #tpu.pipeline_mode<synchronous>, transform_indices = @transform_2, window_bounds = array<i64: 32, 1>}, {pipeline_mode = #tpu.pipeline_mode<synchronous>, transform_indices = @transform_3, window_bounds = array<i64: 32, 32>}, {pipeline_mode = #tpu.pipeline_mode<synchronous>, transform_indices = @transform_4, window_bounds = array<i64: 32, 1>}, {pipeline_mode = #tpu.pipeline_mode<synchronous>, transform_indices = @transform_5, window_bounds = array<i64: 32, 1>}, {pipeline_mode = #tpu.pipeline_mode<synchronous>, transform_indices = @transform_6, window_bounds = array<i64: 1, 1>}, {transform_indices = @transform_7, window_bounds = array<i64: 1, 1, 128>}]} {
    %c0 = arith.constant 0 : index
    %c0_0 = arith.constant 0 : index
    %0 = vector.load %arg1[%c0, %c0_0] : memref<4x128xbf16, #tpu.memory_space<vmem>>, vector<4x128xbf16>
    %c0_1 = arith.constant 0 : index
    %c0_2 = arith.constant 0 : index
    %1 = vector.load %arg2[%c0_1, %c0_2] : memref<32x4xbf16, #tpu.memory_space<vmem>>, vector<32x4xbf16>
    %cst = arith.constant dense<0.000000e+00> : vector<32x128xf32>
    %2 = tpu.matmul %1, %0, %cst {dimension_numbers = #tpu.dot_dimension_numbers<[1], [0], [0], [1], [0, 0, 1, 1], [], []>} : vector<32x4xbf16>, vector<4x128xbf16>, vector<32x128xf32> -> vector<32x128xf32>
    %c0_3 = arith.constant 0 : index
    %c0_4 = arith.constant 0 : index
    %3 = vector.load %arg3[%c0_3, %c0_4] : memref<32x1xf32, #tpu.memory_space<vmem>>, vector<32x1xf32>
    %4 = vector.broadcast %3 : vector<32x1xf32> to vector<32x128xf32>
    %5 = arith.addf %2, %4 : vector<32x128xf32>
    %cst_5 = arith.constant 0.000000e+00 : f32
    %6 = vector.broadcast %cst_5 : f32 to vector<32x128xf32>
    %7 = arith.maximumf %5, %6 : vector<32x128xf32>
    %c0_6 = arith.constant 0 : index
    %c0_7 = arith.constant 0 : index
    %8 = vector.load %arg4[%c0_6, %c0_7] : memref<32x32xbf16, #tpu.memory_space<vmem>>, vector<32x32xbf16>
    %9 = arith.truncf %7 : vector<32x128xf32> to vector<32x128xbf16>
    %cst_8 = arith.constant dense<0.000000e+00> : vector<32x128xf32>
    %10 = tpu.matmul %8, %9, %cst_8 {dimension_numbers = #tpu.dot_dimension_numbers<[1], [0], [0], [1], [0, 0, 1, 1], [], []>} : vector<32x32xbf16>, vector<32x128xbf16>, vector<32x128xf32> -> vector<32x128xf32>
    %c0_9 = arith.constant 0 : index
    %c0_10 = arith.constant 0 : index
    %11 = vector.load %arg5[%c0_9, %c0_10] : memref<32x1xf32, #tpu.memory_space<vmem>>, vector<32x1xf32>
    %12 = vector.broadcast %11 : vector<32x1xf32> to vector<32x128xf32>
    %13 = arith.addf %10, %12 : vector<32x128xf32>
    %cst_11 = arith.constant 0.000000e+00 : f32
    %14 = vector.broadcast %cst_11 : f32 to vector<32x128xf32>
    %15 = arith.maximumf %13, %14 : vector<32x128xf32>
    %c0_12 = arith.constant 0 : index
    %c0_13 = arith.constant 0 : index
    %16 = vector.load %arg6[%c0_12, %c0_13] : memref<32x1xf32, #tpu.memory_space<vmem>>, vector<32x1xf32>
    %17 = vector.broadcast %16 : vector<32x1xf32> to vector<32x128xf32>
    %18 = arith.mulf %15, %17 : vector<32x128xf32>
    %cst_14 = arith.constant dense<0.000000e+00> : vector<128xf32>
    %19 = vector.multi_reduction <add>, %18, %cst_14 [0] : vector<32x128xf32> to vector<128xf32>
    %20 = vector.shape_cast %19 : vector<128xf32> to vector<1x128xf32>
    %c0_15 = arith.constant 0 : index
    %c0_16 = arith.constant 0 : index
    %21 = vector.load %arg7[%c0_15, %c0_16] : memref<1x1xf32, #tpu.memory_space<vmem>>, vector<1x1xf32>
    %22 = vector.broadcast %21 : vector<1x1xf32> to vector<1x128xf32>
    %23 = arith.addf %20, %22 : vector<1x128xf32>
    %cst_17 = arith.constant 0.000000e+00 : f32
    %24 = vector.broadcast %cst_17 : f32 to vector<1x128xf32>
    %25 = arith.subf %24, %23 : vector<1x128xf32>
    %26 = math.exp %25 : vector<1x128xf32>
    %cst_18 = arith.constant 1.000000e+00 : f32
    %27 = vector.broadcast %cst_18 : f32 to vector<1x128xf32>
    %28 = arith.addf %27, %26 : vector<1x128xf32>
    %29 = tpu.reciprocal %28 {approx = true} : vector<1x128xf32> -> vector<1x128xf32>
    %30 = vector.shape_cast %29 : vector<1x128xf32> to vector<1x1x128xf32>
    %c0_19 = arith.constant 0 : index
    %c0_20 = arith.constant 0 : index
    %c0_21 = arith.constant 0 : index
    %31 = vector.load %arg8[%c0_19, %c0_20, %c0_21] : memref<1x1x128xf32, #tpu.memory_space<vmem>>, vector<1x1x128xf32>
    tpu.vector_store %arg8[%c0_19, %c0_20, %c0_21], %30 {strides = array<i32>} : memref<1x1x128xf32, #tpu.memory_space<vmem>>, vector<1x1x128xf32>,
    return
  }
  func.func @transform_0(%arg0: i32) -> (i32, i32) {
    %c0_i32 = arith.constant 0 : i32
    %c0_i32_0 = arith.constant 0 : i32
    return %c0_i32, %arg0 : i32, i32
  }
  func.func @transform_1(%arg0: i32) -> (i32, i32) {
    %c0_i32 = arith.constant 0 : i32
    %c0_i32_0 = arith.constant 0 : i32
    %c0_i32_1 = arith.constant 0 : i32
    return %c0_i32, %c0_i32_0 : i32, i32
  }
  func.func @transform_2(%arg0: i32) -> (i32, i32) {
    %c0_i32 = arith.constant 0 : i32
    %c0_i32_0 = arith.constant 0 : i32
    %c0_i32_1 = arith.constant 0 : i32
    return %c0_i32, %c0_i32_0 : i32, i32
  }
  func.func @transform_3(%arg0: i32) -> (i32, i32) {
    %c0_i32 = arith.constant 0 : i32
    %c0_i32_0 = arith.constant 0 : i32
    %c0_i32_1 = arith.constant 0 : i32
    return %c0_i32, %c0_i32_0 : i32, i32
  }
  func.func @transform_4(%arg0: i32) -> (i32, i32) {
    %c0_i32 = arith.constant 0 : i32
    %c0_i32_0 = arith.constant 0 : i32
    %c0_i32_1 = arith.constant 0 : i32
    return %c0_i32, %c0_i32_0 : i32, i32
  }
  func.func @transform_5(%arg0: i32) -> (i32, i32) {
    %c0_i32 = arith.constant 0 : i32
    %c0_i32_0 = arith.constant 0 : i32
    %c0_i32_1 = arith.constant 0 : i32
    return %c0_i32, %c0_i32_0 : i32, i32
  }
  func.func @transform_6(%arg0: i32) -> (i32, i32) {
    %c0_i32 = arith.constant 0 : i32
    %c0_i32_0 = arith.constant 0 : i32
    %c0_i32_1 = arith.constant 0 : i32
    return %c0_i32, %c0_i32_0 : i32, i32
  }
  func.func @transform_7(%arg0: i32) -> (i32, i32, i32) {
    %c0_i32 = arith.constant 0 : i32
    %c0_i32_0 = arith.constant 0 : i32
    %c0_i32_1 = arith.constant 0 : i32
    return %arg0, %c0_i32, %c0_i32_0 : i32, i32, i32
  }
}

</mosaic_0001>

<llo_original>
// kernel: tpu_custom_call.1
$region0: #{tpu_custom_call.1}
  #allocation0 [shape = 'u32[]', space=smem, size = 0x4, offset = 0x4, fixed_abs, tag = 'smem constant byte address 0x4 - core index']
  #allocation1 [shape = 'u32[144,128]{1,0:T(1,128)}', space=vmem, size = 0x12000, scoped, tag = 'internal scratch']
  #allocation2 [shape = 'f32[1,1]{1,0:T(1,128)S(1)}', space=vmem, size = 0x200, scoped, tag = 'scoped memory for tpu_custom_call.1']
  %s0 = inlined_call_operand.vmem [shape: bf16[4,128], index: 0, kind: input, shape index: {}]
  %s1 = inlined_call_operand.vmem [shape: bf16[32,4], index: 1, kind: input, shape index: {}]
  %s2 = inlined_call_operand.vmem [shape: f32[32,1], index: 2, kind: input, shape index: {}]
  %s3 = inlined_call_operand.vmem [shape: bf16[32,32], index: 3, kind: input, shape index: {}]
  %s4 = inlined_call_operand.vmem [shape: f32[32,1], index: 4, kind: input, shape index: {}]
  %s5 = inlined_call_operand.vmem [shape: f32[32,1], index: 5, kind: input, shape index: {}]
  %s6 = inlined_call_operand.<no memory space> [shape: f32[1,1], index: 6, kind: input, shape index: {}]
  %s7 = inlined_call_operand.hbm [shape: f32[1,1,128], index: 7, kind: output, shape index: {}]
  %s8 = sld [smem:[#allocation0]]
  $region38: #{tpu_custom_call.1} parent=0
    _
  %s10 = ssub.s32 1, %s8
  %s11 = scalar_select 0, %s10, %s8
  %v12 = vstv %s6
  %13 = vst [vmem:[#allocation2] sm:$0x1] %v12
  $region1: #{tpu_custom_call.1} parent=0
    #allocation3 [shape = 'u8[512]{0}', space=vmem, size = 0x400, scoped, tag = 'output window, operand 0, single buffered']
    #allocation4 [shape = 's32[1]{0}', space=sflag, size = 0x4, scoped, tag = 'scoped memory for tpu_custom_call.1']
    %14 = vsyncpa [#allocation4], 0
    // Predicated region
    $region2: #{tpu_custom_call.1} parent=1 // pred_check
      _
    $region3: #{tpu_custom_call.1} parent=1 // pred_check_branch
      %16 = sbr.rel (0) target = $region5
    $region4: #{tpu_custom_call.1} parent=1 // pred_region
      _
    $region5: #{tpu_custom_call.1} parent=1 // pred_fallthru
      _
    // Predicated region
    $region6: #{tpu_custom_call.1} parent=1 // pred_check
      _
    $region7: #{tpu_custom_call.1} parent=1 // pred_check_branch
      %18 = sbr.rel (0) target = $region9
    $region8: #{tpu_custom_call.1} parent=1 // pred_region
      _
    $region9: #{tpu_custom_call.1} parent=1 // pred_fallthru
      _
    // Predicated region
    $region10: #{tpu_custom_call.1} parent=1 // pred_check
      _
    $region11: #{tpu_custom_call.1} parent=1 // pred_check_branch
      %20 = sbr.rel (0) target = $region13
    $region12: #{tpu_custom_call.1} parent=1 // pred_region
      _
    $region13: #{tpu_custom_call.1} parent=1 // pred_fallthru
      _
    // Predicated region
    $region14: #{tpu_custom_call.1} parent=1 // pred_check
      _
    $region15: #{tpu_custom_call.1} parent=1 // pred_check_branch
      %22 = sbr.rel (0) target = $region17
    $region16: #{tpu_custom_call.1} parent=1 // pred_region
      _
    $region17: #{tpu_custom_call.1} parent=1 // pred_fallthru
      _
    // Predicated region
    $region18: #{tpu_custom_call.1} parent=1 // pred_check
      _
    $region19: #{tpu_custom_call.1} parent=1 // pred_check_branch
      %24 = sbr.rel (0) target = $region21
    $region20: #{tpu_custom_call.1} parent=1 // pred_region
      _
    $region21: #{tpu_custom_call.1} parent=1 // pred_fallthru
      _
    // Predicated region
    $region22: #{tpu_custom_call.1} parent=1 // pred_check
      _
    $region23: #{tpu_custom_call.1} parent=1 // pred_check_branch
      %26 = sbr.rel (0) target = $region25
    $region24: #{tpu_custom_call.1} parent=1 // pred_region
      _
    $region25: #{tpu_custom_call.1} parent=1 // pred_fallthru
      _
    // Predicated region
    $region26: #{tpu_custom_call.1} parent=1 // pred_check
      _
    $region27: #{tpu_custom_call.1} parent=1 // pred_check_branch
      %28 = sbr.rel (0) target = $region29
    $region28: #{tpu_custom_call.1} parent=1 // pred_region
      _
    $region29: #{tpu_custom_call.1} parent=1 // pred_fallthru
      _
    %v30 = vld [vmem:[%s0] sm:$0x3]
    %v31 = vld [vmem:[%s1] sm:$0xf]
    %v32 = vld [vmem:[%s1 + $0x4] sm:$0xf]
    %v33 = vld [vmem:[%s1 + $0x8] sm:$0xf]
    %v34 = vld [vmem:[%s1 + $0xc] sm:$0xf]
    %v35 = vld [vmem:[%s2] sm:$0xff]
    %v36 = vld [vmem:[%s2 + $0x8] sm:$0xff]
    %v37 = vld [vmem:[%s2 + $0x10] sm:$0xff]
    %v38 = vld [vmem:[%s2 + $0x18] sm:$0xff]
    %40 = vset.pattern.permute.xlu0 0
    %41 = vperm.xlu0 %40, %v35
    %v42 = vpop.permute.xlu0 %41
    %45 = vset.pattern.permute.xlu0 0
    %46 = vperm.xlu0 %45, %v36
    %v47 = vpop.permute.xlu0 %46
    %50 = vset.pattern.permute.xlu0 0
    %51 = vperm.xlu0 %50, %v37
    %v52 = vpop.permute.xlu0 %51
    %55 = vset.pattern.permute.xlu0 0
    %56 = vperm.xlu0 %55, %v38
    %v57 = vpop.permute.xlu0 %56
    %v63 = vunpack.c.l.b16 %v31
    %v64 = vunpack.c.l.b16 %v32
    %v65 = vunpack.c.l.b16 %v33
    %v66 = vunpack.c.l.b16 %v34
    %v67 = vpack.c.b16 %v64, %v63
    %v68 = vpack.c.b16 %v66, %v65
    %vm69 = vcmask 31744
    %v71 = vsel %vm69, %v67, 0
    %v74 = vsel %vm69, %v68, 0
    %vm76 = vcmask 1041408
    %v78 = vsel %vm76, %v30, 0
    %80 = vmatprep.subr.bf16.mxu0 0
    %81 = vmatpush1.bf16.msra.mxu0 0
    %82 = vmatprep.subr.bf16.mxu0 0
    %83 = vmatpush1.bf16.msra.mxu0 0
    %84 = vmatprep.subr.bf16.mxu0 0
    %85 = vmatpush1.bf16.msra.mxu0 0
    %86 = vmatprep.subr.bf16.mxu0 0
    %87 = vmatpush1.bf16.msra.mxu0 0
    %88 = vmatprep.subr.bf16.mxu0 0
    %89 = vmatpush1.bf16.msra.mxu0 0
    %90 = vmatprep.subr.bf16.mxu0 0
    %91 = vmatpush1.bf16.msra.mxu0 0
    %92 = vmatprep.subr.bf16.mxu0 0
    %93 = vmatpush1.bf16.msra.mxu0 0
    %94 = vmatprep.subr.bf16.mxu0 0
    %95 = vmatpush1.bf16.msra.mxu0 %v78
    %96 = vmatprep.subr.bf16.mxu0 0
    %97 = vmatpush2.bf16.msra.mxu0 0
    %98 = vmatprep.subr.bf16.mxu0 0
    %99 = vmatpush2.bf16.msra.mxu0 0
    %100 = vmatprep.subr.bf16.mxu0 0
    %101 = vmatpush2.bf16.msra.mxu0 0
    %102 = vmatprep.subr.bf16.mxu0 0
    %103 = vmatpush2.bf16.msra.mxu0 0
    %104 = vmatprep.subr.bf16.mxu0 0
    %105 = vmatpush2.bf16.msra.mxu0 0
    %106 = vmatprep.subr.bf16.mxu0 0
    %107 = vmatpush2.bf16.msra.mxu0 0
    %108 = vmatprep.subr.bf16.mxu0 0
    %109 = vmatpush2.bf16.msra.mxu0 0
    %110 = vmatprep.subr.bf16.mxu0 0
    %111 = vmatpush2.bf16.msra.mxu0 0
    %112 = vmatprep.mubr.bf16.mxu0 0
    %113 = vmatmul.mubr.bf16.gmra.mxu0 %v71
    %v114 = vpop.f32.mrf.mxu0
    %v115 = vadd.f32 %v42, %v114
    %v116 = vpop.f32.mrf.mxu0
    %v117 = vpop.f32.mrf.mxu0
    %v118 = vadd.f32 %v47, %v117
    %v119 = vpop.f32.mrf.mxu0
    %120 = vmatprep.mubr.bf16.mxu0 0
    %121 = vmatmul.mubr.bf16.gmra.mxu0 %v74
    %v122 = vpop.f32.mrf.mxu0
    %v123 = vadd.f32 %v52, %v122
    %v124 = vpop.f32.mrf.mxu0
    %v125 = vpop.f32.mrf.mxu0
    %v126 = vadd.f32 %v57, %v125
    %v127 = vpop.f32.mrf.mxu0
    %128 = vdwg.mxu0
    %v129 = vmax.f32 %v115, 0.0
    %v130 = vmax.f32 %v118, 0.0
    %v131 = vmax.f32 %v123, 0.0
    %v132 = vmax.f32 %v126, 0.0
    %v133 = vld [vmem:[%s3] sm:$0xf]
    %v134 = vld [vmem:[%s3 + $0x4] sm:$0xf]
    %v135 = vld [vmem:[%s3 + $0x8] sm:$0xf]
    %v136 = vld [vmem:[%s3 + $0xc] sm:$0xf]
    %v137 = vpack.c.bf16 %v130, %v129
    %v138 = vpack.c.bf16 %v132, %v131
    %v139 = vld [vmem:[%s4] sm:$0xff]
    %v140 = vld [vmem:[%s4 + $0x8] sm:$0xff]
    %v141 = vld [vmem:[%s4 + $0x10] sm:$0xff]
    %v142 = vld [vmem:[%s4 + $0x18] sm:$0xff]
    %144 = vset.pattern.permute.xlu0 0
    %145 = vperm.xlu0 %144, %v139
    %v146 = vpop.permute.xlu0 %145
    %149 = vset.pattern.permute.xlu0 0
    %150 = vperm.xlu0 %149, %v140
    %v151 = vpop.permute.xlu0 %150
    %154 = vset.pattern.permute.xlu0 0
    %155 = vperm.xlu0 %154, %v141
    %v156 = vpop.permute.xlu0 %155
    %159 = vset.pattern.permute.xlu0 0
    %160 = vperm.xlu0 %159, %v142
    %v161 = vpop.permute.xlu0 %160
    %v167 = vunpack.c.l.b16 %v133
    %v168 = vunpack.c.l.b16 %v134
    %v169 = vunpack.c.l.b16 %v135
    %v170 = vunpack.c.l.b16 %v136
    %v171 = vpack.c.b16 %v168, %v167
    %v172 = vpack.c.b16 %v170, %v169
    %vm173 = vcmask 261120
    %v175 = vsel %vm173, %v171, 0
    %v178 = vsel %vm173, %v172, 0
    %180 = vmatprep.subr.bf16.mxu0 0
    %181 = vmatpush1.bf16.msra.mxu0 0
    %182 = vmatprep.subr.bf16.mxu0 0
    %183 = vmatpush1.bf16.msra.mxu0 0
    %184 = vmatprep.subr.bf16.mxu0 0
    %185 = vmatpush1.bf16.msra.mxu0 0
    %186 = vmatprep.subr.bf16.mxu0 0
    %187 = vmatpush1.bf16.msra.mxu0 0
    %188 = vmatprep.subr.bf16.mxu0 0
    %189 = vmatpush1.bf16.msra.mxu0 0
    %190 = vmatprep.subr.bf16.mxu0 0
    %191 = vmatpush1.bf16.msra.mxu0 0
    %192 = vmatprep.subr.bf16.mxu0 0
    %193 = vmatpush1.bf16.msra.mxu0 %v138
    %194 = vmatprep.subr.bf16.mxu0 0
    %195 = vmatpush1.bf16.msra.mxu0 %v137
    %196 = vmatprep.subr.bf16.mxu0 0
    %197 = vmatpush2.bf16.msra.mxu0 0
    %198 = vmatprep.subr.bf16.mxu0 0
    %199 = vmatpush2.bf16.msra.mxu0 0
    %200 = vmatprep.subr.bf16.mxu0 0
    %201 = vmatpush2.bf16.msra.mxu0 0
    %202 = vmatprep.subr.bf16.mxu0 0
    %203 = vmatpush2.bf16.msra.mxu0 0
    %204 = vmatprep.subr.bf16.mxu0 0
    %205 = vmatpush2.bf16.msra.mxu0 0
    %206 = vmatprep.subr.bf16.mxu0 0
    %207 = vmatpush2.bf16.msra.mxu0 0
    %208 = vmatprep.subr.bf16.mxu0 0
    %209 = vmatpush2.bf16.msra.mxu0 0
    %210 = vmatprep.subr.bf16.mxu0 0
    %211 = vmatpush2.bf16.msra.mxu0 0
    %212 = vmatprep.mubr.bf16.mxu0 0
    %213 = vmatmul.mubr.bf16.gmra.mxu0 %v175
    %v214 = vpop.f32.mrf.mxu0
    %v215 = vadd.f32 %v146, %v214
    %v216 = vpop.f32.mrf.mxu0
    %v217 = vpop.f32.mrf.mxu0
    %v218 = vadd.f32 %v151, %v217
    %v219 = vpop.f32.mrf.mxu0
    %220 = vmatprep.mubr.bf16.mxu0 0
    %221 = vmatmul.mubr.bf16.gmra.mxu0 %v178
    %v222 = vpop.f32.mrf.mxu0
    %v223 = vadd.f32 %v156, %v222
    %v224 = vpop.f32.mrf.mxu0
    %v225 = vpop.f32.mrf.mxu0
    %v226 = vadd.f32 %v161, %v225
    %v227 = vpop.f32.mrf.mxu0
    %228 = vdwg.mxu0
    %v229 = vmax.f32 %v215, 0.0
    %v230 = vmax.f32 %v218, 0.0
    %v231 = vmax.f32 %v223, 0.0
    %v232 = vmax.f32 %v226, 0.0
    %v233 = vld [vmem:[%s5] sm:$0xff]
    %v234 = vld [vmem:[%s5 + $0x8] sm:$0xff]
    %v235 = vld [vmem:[%s5 + $0x10] sm:$0xff]
    %v236 = vld [vmem:[%s5 + $0x18] sm:$0xff]
    %238 = vset.pattern.permute.xlu0 0
    %239 = vperm.xlu0 %238, %v233
    %v240 = vpop.permute.xlu0 %239
    %243 = vset.pattern.permute.xlu0 0
    %244 = vperm.xlu0 %243, %v234
    %v245 = vpop.permute.xlu0 %244
    %248 = vset.pattern.permute.xlu0 0
    %249 = vperm.xlu0 %248, %v235
    %v250 = vpop.permute.xlu0 %249
    %253 = vset.pattern.permute.xlu0 0
    %254 = vperm.xlu0 %253, %v236
    %v255 = vpop.permute.xlu0 %254
    %v257 = vmul.f32 %v229, %v240
    %v258 = vmul.f32 %v230, %v245
    %v259 = vmul.f32 %v231, %v250
    %v260 = vmul.f32 %v232, %v255
    %v261 = vadd.f32 %v257, %v258
    %v262 = vadd.f32 %v261, %v259
    %v263 = vadd.f32 %v262, %v260
    %v264 = vrot.slane %v263, 4
    %v265 = vadd.f32 %v263, %v264
    %v266 = vrot.slane %v265, 2
    %v267 = vadd.f32 %v265, %v266
    %v268 = vrot.slane %v267, 1
    %v269 = vadd.f32 %v267, %v268
    %v270 = vld [vmem:[#allocation2] sm:$0x1]
    %272 = vset.pattern.permute.xlu0 0
    %273 = vperm.xlu0 %272, %v270
    %v274 = vpop.permute.xlu0 %273
    %v276 = vlaneseq
    %v277 = vshrl.u32 %v276, 7
    %v278 = vsub.s32 0, %v277
    %v279 = vrot.slane %v274, %v278
    %v280 = vadd.f32 %v269, %v279
    %v281 = vsub.f32 0.0, %v280
    %v282 = vmul.f32 %v281, 1.442695
    %v283 = vpow.pop %v282
    %v284 = vadd.f32 %v283, 1.0
    %v285 = vrcp.pop %v284
    %286 = vst [vmem:[#allocation3] sm:$0x1] %v285
    // Predicated region
    $region30: #{tpu_custom_call.1} parent=1 // pred_check
      _
    $region31: #{tpu_custom_call.1} parent=1 // pred_check_branch
      %288 = sbr.rel (0) target = $region33
    $region32: #{tpu_custom_call.1} parent=1 // pred_region
      %s290 = ssub.s32 16, 16
      %291 = vsyncadd [#allocation4], %s290
      %s293 = sshll.u32 [#allocation3], 4
      %s294 = int_to_ptr.vmem [resolvable:$true] %s293
      %296 = dma.vmem_to_hbm [thread:$0]  %s294, 16, %s7, [#allocation4]
    $region33: #{tpu_custom_call.1} parent=1 // pred_fallthru
      _
    // Predicated region
    $region34: #{tpu_custom_call.1} parent=1 // pred_check
      _
    $region35: #{tpu_custom_call.1} parent=1 // pred_check_branch
      %298 = sbr.rel (0) target = $region37
    $region36: #{tpu_custom_call.1} parent=1 // pred_region
      %299 = dma.done [#allocation4], 16
    $region37: #{tpu_custom_call.1} parent=1 // pred_fallthru
      _
    %300 = vsyncpa [#allocation4], 1

</llo_original>
